<compile_context>
chip_gen: v7x
topology: tpu7x:2x2x1
jax: 0.10.0
libtpu: 0.0.40
codegen_flags: <defaults>
</compile_context>

<pallas_src>
import functools

import jax
import jax.numpy as jnp
from jax import lax
from jax.experimental import pallas as pl
from jax.experimental.pallas import tpu as pltpu

EPS = 1e-5


def _round_up(n, m):
    return ((n + m - 1) // m) * m


def _sk_kernel(K3p, inv_hw,
               x_ref,     # (Kp, HW)   im2col patches; center-3x3 taps in rows [0, K3p)
               w3_ref,    # (F, K3p)   3x3 weights, BN scale folded (compute dtype)
               w5_ref,    # (F, Kp)    5x5 weights, BN scale folded (compute dtype)
               sh3_ref,   # (F, 1)     folded conv-bias + BN shift, branch 3 (f32)
               sh5_ref,   # (F, 1)     folded conv-bias + BN shift, branch 5 (f32)
               wf_ref,    # (F, FR)    fuse dense weights, BN scale folded (f32)
               fsh_ref,   # (1, FR)    fuse dense folded bias + BN shift (f32)
               wa3_ref,   # (F, FR)    attention 1x1-conv weights, branch 3 (f32)
               wa5_ref,   # (F, FR)    attention 1x1-conv weights, branch 5 (f32)
               ba3_ref,   # (F, 1)     attention bias, branch 3 (f32)
               ba5_ref,   # (F, 1)     attention bias, branch 5 (f32)
               out_ref):  # (F, HW)    lane-dense output (reshapes straight to NCHW)
    # Split branches: two MXU matmuls with f32 accumulation.  The 3x3 branch contracts
    # only over the leading K3p rows, so no MACs are spent on structural zeros.
    b3 = jnp.dot(w3_ref[...], x_ref[:K3p, :], preferred_element_type=jnp.float32)
    b5 = jnp.dot(w5_ref[...], x_ref[...], preferred_element_type=jnp.float32)
    b3 = jnp.maximum(b3 + sh3_ref[...], 0.0)      # folded bias/BN shift, then ReLU (f32)
    b5 = jnp.maximum(b5 + sh5_ref[...], 0.0)

    # Fuse: global average pool of U = b3 + b5 WITHOUT materializing U, then
    # Dense -> BN1d -> ReLU.  Tiny (F,1)/(1,FR) work on VPU/XLU.
    s = (jnp.sum(b3, axis=1, keepdims=True)
         + jnp.sum(b5, axis=1, keepdims=True)) * inv_hw                   # (F, 1)
    z = jnp.sum(wf_ref[...] * s, axis=0, keepdims=True) + fsh_ref[...]    # (1, FR)
    z = jnp.maximum(z, 0.0)

    # Attention 1x1 convs (one per branch) + softmax over the branch axis.
    a3 = jnp.sum(wa3_ref[...] * z, axis=1, keepdims=True) + ba3_ref[...]  # (F, 1)
    a5 = jnp.sum(wa5_ref[...] * z, axis=1, keepdims=True) + ba5_ref[...]  # (F, 1)
    m = jnp.maximum(a3, a5)
    e3 = jnp.exp(a3 - m)
    e5 = jnp.exp(a5 - m)
    inv = pl.reciprocal(e3 + e5, approx=False)    # exact; it is a single (F,1) vector
    out_ref[...] = (b3 * (e3 * inv) + b5 * (e5 * inv)).astype(out_ref.dtype)


def selective_kernel_conv(x_nchw, P, *, compute_dtype=jnp.bfloat16,
                          out_dtype=jnp.float32):
    """SelectiveKernelConv forward (kernels=(3,5), stride 1, 'same', eval-mode BN)."""
    B, C, H, W = x_nchw.shape
    F = P['w3'].shape[-1]
    FR = P['wf'].shape[-1]
    HW = H * W
    assert F % 8 == 0, "F must be a multiple of 8 (sublane tile of the (F, HW) output)"
    assert HW % 128 == 0, "H*W must be a multiple of 128 (lane axis of the matmuls)"

    KS = 5                                  # footprint covering both 3x3 and 5x5
    K3 = 9 * C                              # rows of the center-3x3 taps
    KR = 16 * C                             # rows of the remaining 16 taps
    K3p = _round_up(K3, 16)                 # split point aligned for bf16 (16) and f32 (8)
    Kp = _round_up(K3p + KR, 256)           # 256-deep MXU on v6e/v7x; also 128-mult for v5e

    # Tap order: center 3x3 first (shared by both branches), then the 16 outer taps.
    center = [(dy, dx) for dy in (1, 2, 3) for dx in (1, 2, 3)]
    outer = [(dy, dx) for dy in range(KS) for dx in range(KS) if (dy, dx) not in center]

    # ---- host-side layout plumbing: NCHW -> NHWC -> im2col -> (B, Kp, HW) ----
    x = jnp.transpose(x_nchw, (0, 2, 3, 1)).astype(jnp.float32)
    xp = jnp.pad(x, ((0, 0), (2, 2), (2, 2), (0, 0)))

    def tap_rows(tap_list):
        taps = [xp[:, dy:dy + H, dx:dx + W, :] for dy, dx in tap_list]
        return jnp.stack(taps, axis=3).reshape(B, HW, len(tap_list) * C)

    pc = tap_rows(center)                                                 # (B, HW, K3)
    po = tap_rows(outer)                                                  # (B, HW, KR)
    patches = jnp.concatenate(
        [pc, jnp.zeros((B, HW, K3p - K3), jnp.float32),
         po, jnp.zeros((B, HW, Kp - K3p - KR), jnp.float32)], axis=2)
    patches_t = jnp.transpose(patches, (0, 2, 1)).astype(compute_dtype)   # (B, Kp, HW)

    # ---- fold conv bias + BatchNorm into a weight scale and an additive shift ----
    def fold_bn(bias, gamma, beta, mean, var):
        scale = gamma / jnp.sqrt(var + EPS)
        shift = beta + (bias - mean) * scale
        return scale, shift

    sc3, sh3 = fold_bn(P['b3'], P['g3'], P['be3'], P['m3'], P['v3'])
    sc5, sh5 = fold_bn(P['b5'], P['g5'], P['be5'], P['m5'], P['v5'])
    fsc, fsh = fold_bn(P['bf'], P['gf'], P['bef'], P['mf'], P['vf'])

    w3s = P['w3'] * sc3                                                   # (3,3,C,F)
    w5s = P['w5'] * sc5                                                   # (5,5,C,F)
    w3_rows = jnp.stack([w3s[dy - 1, dx - 1] for dy, dx in center],
                        axis=0).reshape(K3, F)
    w3_mat = jnp.pad(w3_rows, ((0, K3p - K3), (0, 0))).T                  # (F, K3p)
    w5_c = jnp.stack([w5s[dy, dx] for dy, dx in center], axis=0).reshape(K3, F)
    w5_o = jnp.stack([w5s[dy, dx] for dy, dx in outer], axis=0).reshape(KR, F)
    w5_rows = jnp.concatenate(
        [w5_c, jnp.zeros((K3p - K3, F), jnp.float32),
         w5_o, jnp.zeros((Kp - K3p - KR, F), jnp.float32)], axis=0)
    w5_mat = w5_rows.T                                                    # (F, Kp)

    w3_mat = w3_mat.astype(compute_dtype)
    w5_mat = w5_mat.astype(compute_dtype)

    # Small per-channel tail operands stay f32 (v5e VPU/EUP have no bf16 path).
    sh3_c = sh3.reshape(F, 1)
    sh5_c = sh5.reshape(F, 1)
    wf_s = P['wf'] * fsc                                                  # (F, FR)
    fsh_row = fsh.reshape(1, FR)
    wa3 = P['wa'][0].T                                                    # (F, FR)
    wa5 = P['wa'][1].T
    ba3_c = P['ba'][0].reshape(F, 1)
    ba5_c = P['ba'][1].reshape(F, 1)

    def const_spec(shape):
        # Grid-invariant operand (same block every step): single-buffer it so the
        # VMEM goes to the per-image patch/output blocks instead (v7x: 64 MiB).
        return pl.BlockSpec(shape, lambda b: (0,) * len(shape),
                            pipeline_mode=pl.Buffered(1))

    kernel = functools.partial(_sk_kernel, K3p, 1.0 / HW)
    out = pl.pallas_call(
        kernel,
        out_shape=jax.ShapeDtypeStruct((B, F, HW), out_dtype),
        grid=(B,),
        in_specs=[
            pl.BlockSpec((None, Kp, HW), lambda b: (b, 0, 0)),   # per-image patches
            const_spec((F, K3p)),                                # branch-3 weights
            const_spec((F, Kp)),                                 # branch-5 weights
            const_spec((F, 1)),                                  # branch-3 shift
            const_spec((F, 1)),                                  # branch-5 shift
            const_spec((F, FR)),                                 # fuse dense
            const_spec((1, FR)),                                 # fuse shift
            const_spec((F, FR)),                                 # attention-3 weights
            const_spec((F, FR)),                                 # attention-5 weights
            const_spec((F, 1)),                                  # attention-3 bias
            const_spec((F, 1)),                                  # attention-5 bias
        ],
        out_specs=pl.BlockSpec((None, F, HW), lambda b: (b, 0, 0)),
        compiler_params=pltpu.CompilerParams(
            dimension_semantics=("parallel",),        # images independent -> v7x 2 TCs
            vmem_limit_bytes=48 * 1024 * 1024),       # explicit, headroom under v7x 64 MiB
    )(patches_t, w3_mat, w5_mat, sh3_c, sh5_c, wf_s, fsh_row,
      wa3, wa5, ba3_c, ba5_c)

    return out.reshape(B, F, H, W)                    # (F, HW) layout is already NCHW


def reference(x_nchw, P):
    """Pure-JAX reference of the same forward pass (for correctness check)."""
    x = jnp.transpose(x_nchw, (0, 2, 3, 1)).astype(jnp.float32)

    def branch(w, b, g, beta, m, v):
        y = lax.conv_general_dilated(x, w, window_strides=(1, 1), padding='SAME',
                                     dimension_numbers=('NHWC', 'HWIO', 'NHWC'))
        y = y + b
        y = (y - m) * (g / jnp.sqrt(v + EPS)) + beta
        return jnp.maximum(y, 0.0)

    t3 = branch(P['w3'], P['b3'], P['g3'], P['be3'], P['m3'], P['v3'])
    t5 = branch(P['w5'], P['b5'], P['g5'], P['be5'], P['m5'], P['v5'])
    u = t3 + t5
    s = jnp.mean(u, axis=(1, 2))                                       # (B, F)
    z = s @ P['wf'] + P['bf']
    z = (z - P['mf']) * (P['gf'] / jnp.sqrt(P['vf'] + EPS)) + P['bef']
    z = jnp.maximum(z, 0.0)                                            # (B, FR)
    a0 = z @ P['wa'][0] + P['ba'][0]
    a1 = z @ P['wa'][1] + P['ba'][1]
    a = jax.nn.softmax(jnp.stack([a0, a1], axis=-1), axis=-1)          # (B, F, 2)
    att0 = a[..., 0][:, None, None, :]
    att1 = a[..., 1][:, None, None, :]
    out = t3 * att0 + t5 * att1
    return jnp.transpose(out, (0, 3, 1, 2))


if __name__ == "__main__":
    B, C, H, W = 2, 4, 16, 16
    F, ratio = 8, 4
    FR = F // ratio

    key = jax.random.PRNGKey(0)
    keys = jax.random.split(key, 21)

    def u(k, shape, lo=-0.5, hi=0.5):
        return jax.random.uniform(k, shape, jnp.float32, lo, hi)

    P = dict(
        # split branch k=3: conv weight (HWIO), bias, BN gamma/beta/mean/var
        w3=u(keys[0], (3, 3, C, F)), b3=u(keys[1], (F,)),
        g3=u(keys[2], (F,), 0.5, 1.5), be3=u(keys[3], (F,)),
        m3=u(keys[4], (F,)), v3=u(keys[5], (F,), 0.5, 1.5),
        # split branch k=5
        w5=u(keys[6], (5, 5, C, F)), b5=u(keys[7], (F,)),
        g5=u(keys[8], (F,), 0.5, 1.5), be5=u(keys[9], (F,)),
        m5=u(keys[10], (F,)), v5=u(keys[11], (F,), 0.5, 1.5),
        # fuse: dense F -> F//ratio, bias, BN1d params
        wf=u(keys[12], (F, FR)), bf=u(keys[13], (FR,)),
        gf=u(keys[14], (FR,), 0.5, 1.5), bef=u(keys[15], (FR,)),
        mf=u(keys[16], (FR,)), vf=u(keys[17], (FR,), 0.5, 1.5),
        # attention 1x1 convs (one per kernel branch), with bias
        wa=u(keys[18], (2, FR, F)), ba=u(keys[19], (2, F)),
    )

    x = jax.random.normal(keys[20], (B, C, H, W), jnp.float32)
    ref = reference(x, P)

    # Strict correctness gate: f32 compute matches the f32 reference at 1e-4.
    out_f32 = jax.block_until_ready(
        selective_kernel_conv(x, P, compute_dtype=jnp.float32, out_dtype=jnp.float32))
    assert out_f32.shape == (B, F, H, W)
    assert bool(jnp.allclose(out_f32, ref, atol=1e-4, rtol=1e-4)), (
        f"f32 max abs diff {float(jnp.max(jnp.abs(out_f32 - ref)))}")

    # Performance default: bf16 operands (f32 accumulation in the MXU) + bf16 output.
    # Looser tolerance reflects bf16 input/output quantization, not a kernel bug.
    out_bf16 = jax.block_until_ready(
        selective_kernel_conv(x, P, out_dtype=jnp.bfloat16))    # compute_dtype=bf16
    assert out_bf16.dtype == jnp.bfloat16 and out_bf16.shape == (B, F, H, W)
    diff = jnp.abs(out_bf16.astype(jnp.float32) - ref)
    assert bool(jnp.all(diff <= 1e-1 + 2e-2 * jnp.abs(ref))), (
        f"bf16 max abs diff {float(jnp.max(diff))}")

    print("KERNEL_OK")
</pallas_src>

<mosaic_0001>
module attributes {stable_mosaic.version = 11 : i64} {
  func.func @_sk_kernel(%arg0: i32, %arg1: memref<1x256x256xf32, #tpu.memory_space<vmem>>, %arg2: memref<8x48xf32, #tpu.memory_space<vmem>>, %arg3: memref<8x256xf32, #tpu.memory_space<vmem>>, %arg4: memref<8x1xf32, #tpu.memory_space<vmem>>, %arg5: memref<8x1xf32, #tpu.memory_space<vmem>>, %arg6: memref<8x2xf32, #tpu.memory_space<vmem>>, %arg7: memref<1x2xf32, #tpu.memory_space<vmem>>, %arg8: memref<8x2xf32, #tpu.memory_space<vmem>>, %arg9: memref<8x2xf32, #tpu.memory_space<vmem>>, %arg10: memref<8x1xf32, #tpu.memory_space<vmem>>, %arg11: memref<8x1xf32, #tpu.memory_space<vmem>>, %arg12: memref<1x8x256xf32, #tpu.memory_space<vmem>>) attributes {dimension_semantics = [#tpu.dimension_semantics<parallel>], iteration_bounds = array<i64: 2>, scalar_prefetch = 0 : i64, scratch_operands = 0 : i64, tpu.core_type = #tpu.core_type<tc>, window_params = [{transform_indices = @transform_0, window_bounds = array<i64: 1, 256, 256>}, {pipeline_mode = #tpu.pipeline_mode<synchronous>, transform_indices = @transform_1, window_bounds = array<i64: 8, 48>}, {pipeline_mode = #tpu.pipeline_mode<synchronous>, transform_indices = @transform_2, window_bounds = array<i64: 8, 256>}, {pipeline_mode = #tpu.pipeline_mode<synchronous>, transform_indices = @transform_3, window_bounds = array<i64: 8, 1>}, {pipeline_mode = #tpu.pipeline_mode<synchronous>, transform_indices = @transform_4, window_bounds = array<i64: 8, 1>}, {pipeline_mode = #tpu.pipeline_mode<synchronous>, transform_indices = @transform_5, window_bounds = array<i64: 8, 2>}, {pipeline_mode = #tpu.pipeline_mode<synchronous>, transform_indices = @transform_6, window_bounds = array<i64: 1, 2>}, {pipeline_mode = #tpu.pipeline_mode<synchronous>, transform_indices = @transform_7, window_bounds = array<i64: 8, 2>}, {pipeline_mode = #tpu.pipeline_mode<synchronous>, transform_indices = @transform_8, window_bounds = array<i64: 8, 2>}, {pipeline_mode = #tpu.pipeline_mode<synchronous>, transform_indices = @transform_9, window_bounds = array<i64: 8, 1>}, {pipeline_mode = #tpu.pipeline_mode<synchronous>, transform_indices = @transform_10, window_bounds = array<i64: 8, 1>}, {transform_indices = @transform_11, window_bounds = array<i64: 1, 8, 256>}]} {
    %c0 = arith.constant 0 : index
    %c0_0 = arith.constant 0 : index
    %0 = vector.load %arg2[%c0, %c0_0] : memref<8x48xf32, #tpu.memory_space<vmem>>, vector<8x48xf32>
    %c0_1 = arith.constant 0 : index
    %c0_2 = arith.constant 0 : index
    %c0_3 = arith.constant 0 : index
    %1 = vector.load %arg1[%c0_1, %c0_2, %c0_3] : memref<1x256x256xf32, #tpu.memory_space<vmem>>, vector<1x48x256xf32>
    %2 = vector.shape_cast %1 : vector<1x48x256xf32> to vector<48x256xf32>
    %cst = arith.constant dense<0.000000e+00> : vector<8x256xf32>
    %3 = tpu.matmul %0, %2, %cst {dimension_numbers = #tpu.dot_dimension_numbers<[1], [0], [0], [1], [0, 0, 1, 1], [], []>} : vector<8x48xf32>, vector<48x256xf32>, vector<8x256xf32> -> vector<8x256xf32>
    %c0_4 = arith.constant 0 : index
    %c0_5 = arith.constant 0 : index
    %4 = vector.load %arg3[%c0_4, %c0_5] : memref<8x256xf32, #tpu.memory_space<vmem>>, vector<8x256xf32>
    %c0_6 = arith.constant 0 : index
    %c0_7 = arith.constant 0 : index
    %c0_8 = arith.constant 0 : index
    %5 = vector.load %arg1[%c0_6, %c0_7, %c0_8] : memref<1x256x256xf32, #tpu.memory_space<vmem>>, vector<1x256x256xf32>
    %6 = vector.shape_cast %5 : vector<1x256x256xf32> to vector<256x256xf32>
    %cst_9 = arith.constant dense<0.000000e+00> : vector<8x256xf32>
    %7 = tpu.matmul %4, %6, %cst_9 {dimension_numbers = #tpu.dot_dimension_numbers<[1], [0], [0], [1], [0, 0, 1, 1], [], []>} : vector<8x256xf32>, vector<256x256xf32>, vector<8x256xf32> -> vector<8x256xf32>
    %c0_10 = arith.constant 0 : index
    %c0_11 = arith.constant 0 : index
    %8 = vector.load %arg4[%c0_10, %c0_11] : memref<8x1xf32, #tpu.memory_space<vmem>>, vector<8x1xf32>
    %9 = vector.broadcast %8 : vector<8x1xf32> to vector<8x256xf32>
    %10 = arith.addf %3, %9 : vector<8x256xf32>
    %cst_12 = arith.constant 0.000000e+00 : f32
    %11 = vector.broadcast %cst_12 : f32 to vector<8x256xf32>
    %12 = arith.maximumf %10, %11 : vector<8x256xf32>
    %c0_13 = arith.constant 0 : index
    %c0_14 = arith.constant 0 : index
    %13 = vector.load %arg5[%c0_13, %c0_14] : memref<8x1xf32, #tpu.memory_space<vmem>>, vector<8x1xf32>
    %14 = vector.broadcast %13 : vector<8x1xf32> to vector<8x256xf32>
    %15 = arith.addf %7, %14 : vector<8x256xf32>
    %cst_15 = arith.constant 0.000000e+00 : f32
    %16 = vector.broadcast %cst_15 : f32 to vector<8x256xf32>
    %17 = arith.maximumf %15, %16 : vector<8x256xf32>
    %cst_16 = arith.constant dense<0.000000e+00> : vector<8xf32>
    %18 = vector.multi_reduction <add>, %12, %cst_16 [1] : vector<8x256xf32> to vector<8xf32>
    %19 = vector.shape_cast %18 : vector<8xf32> to vector<8x1xf32>
    %cst_17 = arith.constant dense<0.000000e+00> : vector<8xf32>
    %20 = vector.multi_reduction <add>, %17, %cst_17 [1] : vector<8x256xf32> to vector<8xf32>
    %21 = vector.shape_cast %20 : vector<8xf32> to vector<8x1xf32>
    %22 = arith.addf %19, %21 : vector<8x1xf32>
    %cst_18 = arith.constant 3.906250e-03 : f32
    %23 = vector.broadcast %cst_18 : f32 to vector<8x1xf32>
    %24 = arith.mulf %22, %23 : vector<8x1xf32>
    %c0_19 = arith.constant 0 : index
    %c0_20 = arith.constant 0 : index
    %25 = vector.load %arg6[%c0_19, %c0_20] : memref<8x2xf32, #tpu.memory_space<vmem>>, vector<8x2xf32>
    %26 = vector.broadcast %24 : vector<8x1xf32> to vector<8x2xf32>
    %27 = arith.mulf %25, %26 : vector<8x2xf32>
    %cst_21 = arith.constant dense<0.000000e+00> : vector<2xf32>
    %28 = vector.multi_reduction <add>, %27, %cst_21 [0] : vector<8x2xf32> to vector<2xf32>
    %29 = vector.shape_cast %28 : vector<2xf32> to vector<1x2xf32>
    %c0_22 = arith.constant 0 : index
    %c0_23 = arith.constant 0 : index
    %30 = vector.load %arg7[%c0_22, %c0_23] : memref<1x2xf32, #tpu.memory_space<vmem>>, vector<1x2xf32>
    %31 = arith.addf %29, %30 : vector<1x2xf32>
    %cst_24 = arith.constant 0.000000e+00 : f32
    %32 = vector.broadcast %cst_24 : f32 to vector<1x2xf32>
    %33 = arith.maximumf %31, %32 : vector<1x2xf32>
    %c0_25 = arith.constant 0 : index
    %c0_26 = arith.constant 0 : index
    %34 = vector.load %arg8[%c0_25, %c0_26] : memref<8x2xf32, #tpu.memory_space<vmem>>, vector<8x2xf32>
    %35 = vector.broadcast %33 : vector<1x2xf32> to vector<8x2xf32>
    %36 = arith.mulf %34, %35 : vector<8x2xf32>
    %cst_27 = arith.constant dense<0.000000e+00> : vector<8xf32>
    %37 = vector.multi_reduction <add>, %36, %cst_27 [1] : vector<8x2xf32> to vector<8xf32>
    %38 = vector.shape_cast %37 : vector<8xf32> to vector<8x1xf32>
    %c0_28 = arith.constant 0 : index
    %c0_29 = arith.constant 0 : index
    %39 = vector.load %arg10[%c0_28, %c0_29] : memref<8x1xf32, #tpu.memory_space<vmem>>, vector<8x1xf32>
    %40 = arith.addf %38, %39 : vector<8x1xf32>
    %c0_30 = arith.constant 0 : index
    %c0_31 = arith.constant 0 : index
    %41 = vector.load %arg9[%c0_30, %c0_31] : memref<8x2xf32, #tpu.memory_space<vmem>>, vector<8x2xf32>
    %42 = vector.broadcast %33 : vector<1x2xf32> to vector<8x2xf32>
    %43 = arith.mulf %41, %42 : vector<8x2xf32>
    %cst_32 = arith.constant dense<0.000000e+00> : vector<8xf32>
    %44 = vector.multi_reduction <add>, %43, %cst_32 [1] : vector<8x2xf32> to vector<8xf32>
    %45 = vector.shape_cast %44 : vector<8xf32> to vector<8x1xf32>
    %c0_33 = arith.constant 0 : index
    %c0_34 = arith.constant 0 : index
    %46 = vector.load %arg11[%c0_33, %c0_34] : memref<8x1xf32, #tpu.memory_space<vmem>>, vector<8x1xf32>
    %47 = arith.addf %45, %46 : vector<8x1xf32>
    %48 = arith.maximumf %40, %47 : vector<8x1xf32>
    %49 = arith.subf %40, %48 : vector<8x1xf32>
    %50 = math.exp %49 : vector<8x1xf32>
    %51 = arith.subf %47, %48 : vector<8x1xf32>
    %52 = math.exp %51 : vector<8x1xf32>
    %53 = arith.addf %50, %52 : vector<8x1xf32>
    %54 = tpu.reciprocal %53 : vector<8x1xf32> -> vector<8x1xf32>
    %55 = arith.mulf %50, %54 : vector<8x1xf32>
    %56 = vector.broadcast %55 : vector<8x1xf32> to vector<8x256xf32>
    %57 = arith.mulf %12, %56 : vector<8x256xf32>
    %58 = arith.mulf %52, %54 : vector<8x1xf32>
    %59 = vector.broadcast %58 : vector<8x1xf32> to vector<8x256xf32>
    %60 = arith.mulf %17, %59 : vector<8x256xf32>
    %61 = arith.addf %57, %60 : vector<8x256xf32>
    %c0_35 = arith.constant 0 : index
    %c0_36 = arith.constant 0 : index
    %c0_37 = arith.constant 0 : index
    %62 = vector.load %arg12[%c0_35, %c0_36, %c0_37] : memref<1x8x256xf32, #tpu.memory_space<vmem>>, vector<1x8x256xf32>
    %63 = vector.shape_cast %62 : vector<1x8x256xf32> to vector<8x256xf32>
    %64 = vector.shape_cast %61 : vector<8x256xf32> to vector<1x8x256xf32>
    tpu.vector_store %arg12[%c0_35, %c0_36, %c0_37], %64 {strides = array<i32>} : memref<1x8x256xf32, #tpu.memory_space<vmem>>, vector<1x8x256xf32>,
    return
  }
  func.func @transform_0(%arg0: i32) -> (i32, i32, i32) {
    %c0_i32 = arith.constant 0 : i32
    %c0_i32_0 = arith.constant 0 : i32
    %c0_i32_1 = arith.constant 0 : i32
    return %arg0, %c0_i32, %c0_i32_0 : i32, i32, i32
  }
  func.func @transform_1(%arg0: i32) -> (i32, i32) {
    %c0_i32 = arith.constant 0 : i32
    %c0_i32_0 = arith.constant 0 : i32
    %c0_i32_1 = arith.constant 0 : i32
    return %c0_i32, %c0_i32_0 : i32, i32
  }
  func.func @transform_2(%arg0: i32) -> (i32, i32) {
    %c0_i32 = arith.constant 0 : i32
    %c0_i32_0 = arith.constant 0 : i32
    %c0_i32_1 = arith.constant 0 : i32
    return %c0_i32, %c0_i32_0 : i32, i32
  }
  func.func @transform_3(%arg0: i32) -> (i32, i32) {
    %c0_i32 = arith.constant 0 : i32
    %c0_i32_0 = arith.constant 0 : i32
    %c0_i32_1 = arith.constant 0 : i32
    return %c0_i32, %c0_i32_0 : i32, i32
  }
  func.func @transform_4(%arg0: i32) -> (i32, i32) {
    %c0_i32 = arith.constant 0 : i32
    %c0_i32_0 = arith.constant 0 : i32
    %c0_i32_1 = arith.constant 0 : i32
    return %c0_i32, %c0_i32_0 : i32, i32
  }
  func.func @transform_5(%arg0: i32) -> (i32, i32) {
    %c0_i32 = arith.constant 0 : i32
    %c0_i32_0 = arith.constant 0 : i32
    %c0_i32_1 = arith.constant 0 : i32
    return %c0_i32, %c0_i32_0 : i32, i32
  }
  func.func @transform_6(%arg0: i32) -> (i32, i32) {
    %c0_i32 = arith.constant 0 : i32
    %c0_i32_0 = arith.constant 0 : i32
    %c0_i32_1 = arith.constant 0 : i32
    return %c0_i32, %c0_i32_0 : i32, i32
  }
  func.func @transform_7(%arg0: i32) -> (i32, i32) {
    %c0_i32 = arith.constant 0 : i32
    %c0_i32_0 = arith.constant 0 : i32
    %c0_i32_1 = arith.constant 0 : i32
    return %c0_i32, %c0_i32_0 : i32, i32
  }
  func.func @transform_8(%arg0: i32) -> (i32, i32) {
    %c0_i32 = arith.constant 0 : i32
    %c0_i32_0 = arith.constant 0 : i32
    %c0_i32_1 = arith.constant 0 : i32
    return %c0_i32, %c0_i32_0 : i32, i32
  }
  func.func @transform_9(%arg0: i32) -> (i32, i32) {
    %c0_i32 = arith.constant 0 : i32
    %c0_i32_0 = arith.constant 0 : i32
    %c0_i32_1 = arith.constant 0 : i32
    return %c0_i32, %c0_i32_0 : i32, i32
  }
  func.func @transform_10(%arg0: i32) -> (i32, i32) {
    %c0_i32 = arith.constant 0 : i32
    %c0_i32_0 = arith.constant 0 : i32
    %c0_i32_1 = arith.constant 0 : i32
    return %c0_i32, %c0_i32_0 : i32, i32
  }
  func.func @transform_11(%arg0: i32) -> (i32, i32, i32) {
    %c0_i32 = arith.constant 0 : i32
    %c0_i32_0 = arith.constant 0 : i32
    %c0_i32_1 = arith.constant 0 : i32
    return %arg0, %c0_i32, %c0_i32_0 : i32, i32, i32
  }
}

</mosaic_0001>

<llo_original>
// kernel: tpu_custom_call.1
$region0: #{tpu_custom_call.1}
  #allocation0 [shape = 'u32[]', space=smem, size = 0x4, offset = 0x4, fixed_abs, tag = 'smem constant byte address 0x4 - core index']
  #allocation1 [shape = 'u32[144,128]{1,0:T(1,128)}', space=vmem, size = 0x12000, scoped, tag = 'internal scratch']
  %s0 = inlined_call_operand.hbm [shape: f32[2,256,256], index: 0, kind: input, shape index: {}]
  %s1 = inlined_call_operand.vmem [shape: f32[8,48], index: 1, kind: input, shape index: {}]
  %s2 = inlined_call_operand.vmem [shape: f32[8,256], index: 2, kind: input, shape index: {}]
  %s3 = inlined_call_operand.vmem [shape: f32[8,1], index: 3, kind: input, shape index: {}]
  %s4 = inlined_call_operand.vmem [shape: f32[8,1], index: 4, kind: input, shape index: {}]
  %s5 = inlined_call_operand.vmem [shape: f32[8,2], index: 5, kind: input, shape index: {}]
  %s6 = inlined_call_operand.vmem [shape: f32[1,2], index: 6, kind: input, shape index: {}]
  %s7 = inlined_call_operand.vmem [shape: f32[8,2], index: 7, kind: input, shape index: {}]
  %s8 = inlined_call_operand.vmem [shape: f32[8,2], index: 8, kind: input, shape index: {}]
  %s9 = inlined_call_operand.vmem [shape: f32[8,1], index: 9, kind: input, shape index: {}]
  %s10 = inlined_call_operand.vmem [shape: f32[8,1], index: 10, kind: input, shape index: {}]
  %s11 = inlined_call_operand.hbm [shape: f32[2,8,256], index: 11, kind: output, shape index: {}]
  %s12 = sld [smem:[#allocation0]]
  $region81: #{tpu_custom_call.1} parent=0
    _
  %s14 = ssub.s32 1, %s12
  %s15 = scalar_select 0, %s14, %s12
  $region1: #{tpu_custom_call.1} parent=0
    #allocation2 [shape = 'u8[524288]{0}', space=vmem, size = 0x80000, scoped, tag = 'input window, operand 0']
    #allocation3 [shape = 's32[2]{0}', space=sflag, size = 0x8, scoped, tag = 'scoped memory for tpu_custom_call.1']
    #allocation4 [shape = 's32[2]{0}', space=sflag, size = 0x8, scoped, tag = 'scoped memory for tpu_custom_call.1']
    #allocation5 [shape = 'u8[16384]{0}', space=vmem, size = 0x4000, scoped, tag = 'output window, operand 0']
    %16 = vsyncpa [#allocation3], 0
    %s17 = scalar_lea.sflag [#allocation3], 1
    %18 = vsyncpa %s17, 0
    %19 = vsyncpa [#allocation4], 0
    %s20 = scalar_lea.sflag [#allocation4], 1
    %21 = vsyncpa %s20, 0
    loop: start=0, step=1, limit=4
    $region2: #{tpu_custom_call.1} parent=1 // loop_pre_header
      _
    $region3: #{tpu_custom_call.1} parent=1 // loop_header
      %s23 = sphi 0, %s27
      %p24 = scmp.ge.s32.totalorder %s23, 4
      %s33 = sphi 0, %s35
      %s36 = sphi 0, %s33
      %s37 = sphi 0, %s36
      %s53 = sphi 0, %s37
      %s57 = sphi 0, %s57
      %s59 = sphi 0, %s57
      %s60 = sphi 0, %s59
      %s74 = sphi 0, %s60
      %s78 = sphi 0, %s78
      %s80 = sphi 0, %s78
      %s81 = sphi 0, %s80
      %s95 = sphi 0, %s81
      %s99 = sphi 0, %s99
      %s101 = sphi 0, %s99
      %s102 = sphi 0, %s101
      %s116 = sphi 0, %s102
      %s120 = sphi 0, %s120
      %s122 = sphi 0, %s120
      %s123 = sphi 0, %s122
      %s137 = sphi 0, %s123
      %s141 = sphi 0, %s141
      %s143 = sphi 0, %s141
      %s144 = sphi 0, %s143
      %s158 = sphi 0, %s144
      %s162 = sphi 0, %s162
      %s164 = sphi 0, %s162
      %s165 = sphi 0, %s164
      %s179 = sphi 0, %s165
      %s183 = sphi 0, %s183
      %s185 = sphi 0, %s183
      %s186 = sphi 0, %s185
      %s200 = sphi 0, %s186
      %s204 = sphi 0, %s204
      %s206 = sphi 0, %s204
      %s207 = sphi 0, %s206
      %s221 = sphi 0, %s207
      %s225 = sphi 0, %s225
      %s227 = sphi 0, %s225
      %s228 = sphi 0, %s227
      %s242 = sphi 0, %s228
      %s246 = sphi 0, %s246
      %s248 = sphi 0, %s246
      %s249 = sphi 0, %s248
      %s263 = sphi 0, %s249
      %s269 = sphi 0, %s271
      %s272 = sphi 0, %s269
      %s273 = sphi 0, %s272
      %s289 = sphi 0, %s273
    $region4: #{tpu_custom_call.1} parent=1 // loop_header_branch
      %26 = sbr.rel (%p24) target = $region8
    $region5: #{tpu_custom_call.1} parent=1 // loop_body
      %s28 = ssub.s32 %s23, 1
      %s29 = ssub.s32 %s23, 2
      %s30 = sadd.s32 %s23, 1
      %s31 = ssub.s32 %s23, %s30
      %p32 = scmp.eq.s32.totalorder %s31, 0
      %s34 = sadd.s32 %s33, 1
      %s35 = scalar_select %p32, %s33, %s34
      %p38 = pneg %p32
      %p39 = scmp.eq.s32.totalorder %s23, 1
      %p40 = por %p38, %p39
      %p41 = scmp.ne.s32.totalorder %s33, %s36
      %p42 = scmp.eq.s32.totalorder %s23, 0
      %p43 = por %p41, %p42
      %p44 = scmp.ne.s32.totalorder %s33, %s36
      %p45 = scmp.eq.s32.totalorder %s28, 1
      %p46 = por %p44, %p45
      %p47 = scmp.ne.s32.totalorder %s36, %s37
      %p48 = scmp.eq.s32.totalorder %s28, 0
      %p49 = por %p47, %p48
      %p50 = scmp.ne.s32.totalorder %s36, %s37
      %p51 = scmp.eq.s32.totalorder %s29, 1
      %p52 = por %p50, %p51
      %p54 = scmp.ne.s32.totalorder %s37, %s53
      %p55 = scmp.eq.s32.totalorder %s29, 0
      %p56 = por %p54, %p55
      %s58 = sadd.s32 %s57, 1
      %p61 = scmp.eq.s32.totalorder %s23, 1
      %p62 = scmp.ne.s32.totalorder %s57, %s59
      %p63 = scmp.eq.s32.totalorder %s23, 0
      %p64 = por %p62, %p63
      %p65 = scmp.ne.s32.totalorder %s57, %s59
      %p66 = scmp.eq.s32.totalorder %s28, 1
      %p67 = por %p65, %p66
      %p68 = scmp.ne.s32.totalorder %s59, %s60
      %p69 = scmp.eq.s32.totalorder %s28, 0
      %p70 = por %p68, %p69
      %p71 = scmp.ne.s32.totalorder %s59, %s60
      %p72 = scmp.eq.s32.totalorder %s29, 1
      %p73 = por %p71, %p72
      %p75 = scmp.ne.s32.totalorder %s60, %s74
      %p76 = scmp.eq.s32.totalorder %s29, 0
      %p77 = por %p75, %p76
      %s79 = sadd.s32 %s78, 1
      %p82 = scmp.eq.s32.totalorder %s23, 1
      %p83 = scmp.ne.s32.totalorder %s78, %s80
      %p84 = scmp.eq.s32.totalorder %s23, 0
      %p85 = por %p83, %p84
      %p86 = scmp.ne.s32.totalorder %s78, %s80
      %p87 = scmp.eq.s32.totalorder %s28, 1
      %p88 = por %p86, %p87
      %p89 = scmp.ne.s32.totalorder %s80, %s81
      %p90 = scmp.eq.s32.totalorder %s28, 0
      %p91 = por %p89, %p90
      %p92 = scmp.ne.s32.totalorder %s80, %s81
      %p93 = scmp.eq.s32.totalorder %s29, 1
      %p94 = por %p92, %p93
      %p96 = scmp.ne.s32.totalorder %s81, %s95
      %p97 = scmp.eq.s32.totalorder %s29, 0
      %p98 = por %p96, %p97
      %s100 = sadd.s32 %s99, 1
      %p103 = scmp.eq.s32.totalorder %s23, 1
      %p104 = scmp.ne.s32.totalorder %s99, %s101
      %p105 = scmp.eq.s32.totalorder %s23, 0
      %p106 = por %p104, %p105
      %p107 = scmp.ne.s32.totalorder %s99, %s101
      %p108 = scmp.eq.s32.totalorder %s28, 1
      %p109 = por %p107, %p108
      %p110 = scmp.ne.s32.totalorder %s101, %s102
      %p111 = scmp.eq.s32.totalorder %s28, 0
      %p112 = por %p110, %p111
      %p113 = scmp.ne.s32.totalorder %s101, %s102
      %p114 = scmp.eq.s32.totalorder %s29, 1
      %p115 = por %p113, %p114
      %p117 = scmp.ne.s32.totalorder %s102, %s116
      %p118 = scmp.eq.s32.totalorder %s29, 0
      %p119 = por %p117, %p118
      %s121 = sadd.s32 %s120, 1
      %p124 = scmp.eq.s32.totalorder %s23, 1
      %p125 = scmp.ne.s32.totalorder %s120, %s122
      %p126 = scmp.eq.s32.totalorder %s23, 0
      %p127 = por %p125, %p126
      %p128 = scmp.ne.s32.totalorder %s120, %s122
      %p129 = scmp.eq.s32.totalorder %s28, 1
      %p130 = por %p128, %p129
      %p131 = scmp.ne.s32.totalorder %s122, %s123
      %p132 = scmp.eq.s32.totalorder %s28, 0
      %p133 = por %p131, %p132
      %p134 = scmp.ne.s32.totalorder %s122, %s123
      %p135 = scmp.eq.s32.totalorder %s29, 1
      %p136 = por %p134, %p135
      %p138 = scmp.ne.s32.totalorder %s123, %s137
      %p139 = scmp.eq.s32.totalorder %s29, 0
      %p140 = por %p138, %p139
      %s142 = sadd.s32 %s141, 1
      %p145 = scmp.eq.s32.totalorder %s23, 1
      %p146 = scmp.ne.s32.totalorder %s141, %s143
      %p147 = scmp.eq.s32.totalorder %s23, 0
      %p148 = por %p146, %p147
      %p149 = scmp.ne.s32.totalorder %s141, %s143
      %p150 = scmp.eq.s32.totalorder %s28, 1
      %p151 = por %p149, %p150
      %p152 = scmp.ne.s32.totalorder %s143, %s144
      %p153 = scmp.eq.s32.totalorder %s28, 0
      %p154 = por %p152, %p153
      %p155 = scmp.ne.s32.totalorder %s143, %s144
      %p156 = scmp.eq.s32.totalorder %s29, 1
      %p157 = por %p155, %p156
      %p159 = scmp.ne.s32.totalorder %s144, %s158
      %p160 = scmp.eq.s32.totalorder %s29, 0
      %p161 = por %p159, %p160
      %s163 = sadd.s32 %s162, 1
      %p166 = scmp.eq.s32.totalorder %s23, 1
      %p167 = scmp.ne.s32.totalorder %s162, %s164
      %p168 = scmp.eq.s32.totalorder %s23, 0
      %p169 = por %p167, %p168
      %p170 = scmp.ne.s32.totalorder %s162, %s164
      %p171 = scmp.eq.s32.totalorder %s28, 1
      %p172 = por %p170, %p171
      %p173 = scmp.ne.s32.totalorder %s164, %s165
      %p174 = scmp.eq.s32.totalorder %s28, 0
      %p175 = por %p173, %p174
      %p176 = scmp.ne.s32.totalorder %s164, %s165
      %p177 = scmp.eq.s32.totalorder %s29, 1
      %p178 = por %p176, %p177
      %p180 = scmp.ne.s32.totalorder %s165, %s179
      %p181 = scmp.eq.s32.totalorder %s29, 0
      %p182 = por %p180, %p181
      %s184 = sadd.s32 %s183, 1
      %p187 = scmp.eq.s32.totalorder %s23, 1
      %p188 = scmp.ne.s32.totalorder %s183, %s185
      %p189 = scmp.eq.s32.totalorder %s23, 0
      %p190 = por %p188, %p189
      %p191 = scmp.ne.s32.totalorder %s183, %s185
      %p192 = scmp.eq.s32.totalorder %s28, 1
      %p193 = por %p191, %p192
      %p194 = scmp.ne.s32.totalorder %s185, %s186
      %p195 = scmp.eq.s32.totalorder %s28, 0
      %p196 = por %p194, %p195
      %p197 = scmp.ne.s32.totalorder %s185, %s186
      %p198 = scmp.eq.s32.totalorder %s29, 1
      %p199 = por %p197, %p198
      %p201 = scmp.ne.s32.totalorder %s186, %s200
      %p202 = scmp.eq.s32.totalorder %s29, 0
      %p203 = por %p201, %p202
      %s205 = sadd.s32 %s204, 1
      %p208 = scmp.eq.s32.totalorder %s23, 1
      %p209 = scmp.ne.s32.totalorder %s204, %s206
      %p210 = scmp.eq.s32.totalorder %s23, 0
      %p211 = por %p209, %p210
      %p212 = scmp.ne.s32.totalorder %s204, %s206
      %p213 = scmp.eq.s32.totalorder %s28, 1
      %p214 = por %p212, %p213
      %p215 = scmp.ne.s32.totalorder %s206, %s207
      %p216 = scmp.eq.s32.totalorder %s28, 0
      %p217 = por %p215, %p216
      %p218 = scmp.ne.s32.totalorder %s206, %s207
      %p219 = scmp.eq.s32.totalorder %s29, 1
      %p220 = por %p218, %p219
      %p222 = scmp.ne.s32.totalorder %s207, %s221
      %p223 = scmp.eq.s32.totalorder %s29, 0
      %p224 = por %p222, %p223
      %s226 = sadd.s32 %s225, 1
      %p229 = scmp.eq.s32.totalorder %s23, 1
      %p230 = scmp.ne.s32.totalorder %s225, %s227
      %p231 = scmp.eq.s32.totalorder %s23, 0
      %p232 = por %p230, %p231
      %p233 = scmp.ne.s32.totalorder %s225, %s227
      %p234 = scmp.eq.s32.totalorder %s28, 1
      %p235 = por %p233, %p234
      %p236 = scmp.ne.s32.totalorder %s227, %s228
      %p237 = scmp.eq.s32.totalorder %s28, 0
      %p238 = por %p236, %p237
      %p239 = scmp.ne.s32.totalorder %s227, %s228
      %p240 = scmp.eq.s32.totalorder %s29, 1
      %p241 = por %p239, %p240
      %p243 = scmp.ne.s32.totalorder %s228, %s242
      %p244 = scmp.eq.s32.totalorder %s29, 0
      %p245 = por %p243, %p244
      %s247 = sadd.s32 %s246, 1
      %p250 = scmp.eq.s32.totalorder %s23, 1
      %p251 = scmp.ne.s32.totalorder %s246, %s248
      %p252 = scmp.eq.s32.totalorder %s23, 0
      %p253 = por %p251, %p252
      %p254 = scmp.ne.s32.totalorder %s246, %s248
      %p255 = scmp.eq.s32.totalorder %s28, 1
      %p256 = por %p254, %p255
      %p257 = scmp.ne.s32.totalorder %s248, %s249
      %p258 = scmp.eq.s32.totalorder %s28, 0
      %p259 = por %p257, %p258
      %p260 = scmp.ne.s32.totalorder %s248, %s249
      %p261 = scmp.eq.s32.totalorder %s29, 1
      %p262 = por %p260, %p261
      %p264 = scmp.ne.s32.totalorder %s249, %s263
      %p265 = scmp.eq.s32.totalorder %s29, 0
      %p266 = por %p264, %p265
      %s267 = ssub.s32 %s23, %s30
      %p268 = scmp.eq.s32.totalorder %s267, 0
      %s270 = sadd.s32 %s269, 1
      %s271 = scalar_select %p268, %s269, %s270
      %p274 = pneg %p268
      %p275 = scmp.eq.s32.totalorder %s23, 1
      %p276 = por %p274, %p275
      %p277 = scmp.ne.s32.totalorder %s269, %s272
      %p278 = scmp.eq.s32.totalorder %s23, 0
      %p279 = por %p277, %p278
      %p280 = scmp.ne.s32.totalorder %s269, %s272
      %p281 = scmp.eq.s32.totalorder %s28, 1
      %p282 = por %p280, %p281
      %p283 = scmp.ne.s32.totalorder %s272, %s273
      %p284 = scmp.eq.s32.totalorder %s28, 0
      %p285 = por %p283, %p284
      %p286 = scmp.ne.s32.totalorder %s272, %s273
      %p287 = scmp.eq.s32.totalorder %s29, 1
      %p288 = por %p286, %p287
      %p290 = scmp.ne.s32.totalorder %s273, %s289
      %p291 = scmp.eq.s32.totalorder %s29, 0
      %p292 = por %p290, %p291
      %p293 = scmp.le.s32.totalorder 1, %s23
      %p294 = scmp.lt.s32.totalorder %s23, 3
      %p295 = pnand %p293, %p294
      %p296 = pneg %p295
      // Predicated region
      $region9: #{tpu_custom_call.1} parent=5 // pred_check
        _
      $region10: #{tpu_custom_call.1} parent=5 // pred_check_branch
        %298 = sbr.rel (%p295) target = $region12
      $region11: #{tpu_custom_call.1} parent=5 // pred_region
        %s299 = ssub.s32 %s23, 1
        // Predicated region
        $region13: #{tpu_custom_call.1} parent=11 // pred_check
          %p300 = pneg %p70
        $region14: #{tpu_custom_call.1} parent=11 // pred_check_branch
          %302 = sbr.rel (%p300) target = $region16
        $region15: #{tpu_custom_call.1} parent=11 // pred_region
          _
        $region16: #{tpu_custom_call.1} parent=11 // pred_fallthru
          _
        // Predicated region
        $region17: #{tpu_custom_call.1} parent=11 // pred_check
          %p303 = pneg %p91
        $region18: #{tpu_custom_call.1} parent=11 // pred_check_branch
          %305 = sbr.rel (%p303) target = $region20
        $region19: #{tpu_custom_call.1} parent=11 // pred_region
          _
        $region20: #{tpu_custom_call.1} parent=11 // pred_fallthru
          _
        // Predicated region
        $region21: #{tpu_custom_call.1} parent=11 // pred_check
          %p306 = pneg %p112
        $region22: #{tpu_custom_call.1} parent=11 // pred_check_branch
          %308 = sbr.rel (%p306) target = $region24
        $region23: #{tpu_custom_call.1} parent=11 // pred_region
          _
        $region24: #{tpu_custom_call.1} parent=11 // pred_fallthru
          _
        // Predicated region
        $region25: #{tpu_custom_call.1} parent=11 // pred_check
          %p309 = pneg %p133
        $region26: #{tpu_custom_call.1} parent=11 // pred_check_branch
          %311 = sbr.rel (%p309) target = $region28
        $region27: #{tpu_custom_call.1} parent=11 // pred_region
          _
        $region28: #{tpu_custom_call.1} parent=11 // pred_fallthru
          _
        // Predicated region
        $region29: #{tpu_custom_call.1} parent=11 // pred_check
          %p312 = pneg %p154
        $region30: #{tpu_custom_call.1} parent=11 // pred_check_branch
          %314 = sbr.rel (%p312) target = $region32
        $region31: #{tpu_custom_call.1} parent=11 // pred_region
          _
        $region32: #{tpu_custom_call.1} parent=11 // pred_fallthru
          _
        // Predicated region
        $region33: #{tpu_custom_call.1} parent=11 // pred_check
          %p315 = pneg %p175
        $region34: #{tpu_custom_call.1} parent=11 // pred_check_branch
          %317 = sbr.rel (%p315) target = $region36
        $region35: #{tpu_custom_call.1} parent=11 // pred_region
          _
        $region36: #{tpu_custom_call.1} parent=11 // pred_fallthru
          _
        // Predicated region
        $region37: #{tpu_custom_call.1} parent=11 // pred_check
          %p318 = pneg %p196
        $region38: #{tpu_custom_call.1} parent=11 // pred_check_branch
          %320 = sbr.rel (%p318) target = $region40
        $region39: #{tpu_custom_call.1} parent=11 // pred_region
          _
        $region40: #{tpu_custom_call.1} parent=11 // pred_fallthru
          _
        // Predicated region
        $region41: #{tpu_custom_call.1} parent=11 // pred_check
          %p321 = pneg %p217
        $region42: #{tpu_custom_call.1} parent=11 // pred_check_branch
          %323 = sbr.rel (%p321) target = $region44
        $region43: #{tpu_custom_call.1} parent=11 // pred_region
          _
        $region44: #{tpu_custom_call.1} parent=11 // pred_fallthru
          _
        // Predicated region
        $region45: #{tpu_custom_call.1} parent=11 // pred_check
          %p324 = pneg %p238
        $region46: #{tpu_custom_call.1} parent=11 // pred_check_branch
          %326 = sbr.rel (%p324) target = $region48
        $region47: #{tpu_custom_call.1} parent=11 // pred_region
          _
        $region48: #{tpu_custom_call.1} parent=11 // pred_fallthru
          _
        // Predicated region
        $region49: #{tpu_custom_call.1} parent=11 // pred_check
          %p327 = pneg %p259
        $region50: #{tpu_custom_call.1} parent=11 // pred_check_branch
          %329 = sbr.rel (%p327) target = $region52
        $region51: #{tpu_custom_call.1} parent=11 // pred_region
          _
        $region52: #{tpu_custom_call.1} parent=11 // pred_fallthru
          _
      $region12: #{tpu_custom_call.1} parent=5 // pred_fallthru
        _
      %p330 = scmp.lt.s32.totalorder %s23, 2
      // Predicated region
      $region53: #{tpu_custom_call.1} parent=5 // pred_check
        %p331 = pneg %p330
      $region54: #{tpu_custom_call.1} parent=5 // pred_check_branch
        %333 = sbr.rel (%p331) target = $region56
      $region55: #{tpu_custom_call.1} parent=5 // pred_region
        // Predicated region
        $region57: #{tpu_custom_call.1} parent=55 // pred_check
          %p334 = pneg %p43
        $region58: #{tpu_custom_call.1} parent=55 // pred_check_branch
          %336 = sbr.rel (%p334) target = $region60
        $region59: #{tpu_custom_call.1} parent=55 // pred_region
          %s337 = sand.u32 %s33, 1
          %s338 = scalar_lea.sflag [#allocation3], %s337
          %s339 = sand.u32 %s33, 1
          %s340 = smul.addr %s339, 512
          %s341 = scalar_lea.vmem [#allocation2], %s340
          %s343 = ssub.s32 8192, 8192
          %344 = vsyncadd %s338, %s343
          %s345 = smul.addr %s23, 64
          %s346 = smul.addr %s345, 128
          %s347 = scalar_lea.hbm %s0, %s346
          %s348 = sshll.u32 %s341, 4
          %s349 = int_to_ptr.vmem [resolvable:$true] %s348
          %354 = dma.hbm_to_vmem [thread:$0]  %s347, 8192, %s349, %s338, 256, 256, 16
        $region60: #{tpu_custom_call.1} parent=55 // pred_fallthru
          _
      $region56: #{tpu_custom_call.1} parent=5 // pred_fallthru
        _
      %p355 = scmp.le.s32.totalorder 1, %s23
      %p356 = scmp.lt.s32.totalorder %s23, 3
      %p357 = pnand %p355, %p356
      %p358 = pneg %p357
      // Predicated region
      $region61: #{tpu_custom_call.1} parent=5 // pred_check
        _
      $region62: #{tpu_custom_call.1} parent=5 // pred_check_branch
        %360 = sbr.rel (%p357) target = $region64
      $region63: #{tpu_custom_call.1} parent=5 // pred_region
        %s361 = ssub.s32 %s23, 1
        %s362 = sand.u32 %s36, 1
        %s363 = scalar_lea.sflag [#allocation3], %s362
        %s364 = sand.u32 %s36, 1
        %s365 = smul.addr %s364, 512
        %s366 = scalar_lea.vmem [#allocation2], %s365
        // Predicated region
        $region65: #{tpu_custom_call.1} parent=63 // pred_check
          %p367 = pneg %p49
        $region66: #{tpu_custom_call.1} parent=63 // pred_check_branch
          %369 = sbr.rel (%p367) target = $region68
        $region67: #{tpu_custom_call.1} parent=63 // pred_region
          %370 = dma.done %s363, 8192
        $region68: #{tpu_custom_call.1} parent=63 // pred_fallthru
          _
        %s371 = sand.u32 %s36, 1
        %s372 = scalar_lea.sflag [#allocation3], %s371
        %s373 = sand.u32 %s36, 1
        %s374 = smul.addr %s373, 512
        %s375 = scalar_lea.vmem [#allocation2], %s374
        %p376 = pneg %p49
        %p377 = pneg %p46
        %p378 = pneg %p70
        %p379 = pneg %p67
        %p380 = pneg %p91
        %p381 = pneg %p88
        %p382 = pneg %p112
        %p383 = pneg %p109
        %p384 = pneg %p133
        %p385 = pneg %p130
        %p386 = pneg %p154
        %p387 = pneg %p151
        %p388 = pneg %p175
        %p389 = pneg %p172
        %p390 = pneg %p196
        %p391 = pneg %p193
        %p392 = pneg %p217
        %p393 = pneg %p214
        %p394 = pneg %p238
        %p395 = pneg %p235
        %p396 = pneg %p259
        %p397 = pneg %p256
        %p398 = pneg %p285
        %p399 = pneg %p282
        %s400 = sand.u32 %s272, 1
        %s401 = scalar_lea.sflag [#allocation4], %s400
        %s402 = sand.u32 %s272, 1
        %s403 = smul.addr %s402, 16
        %s404 = scalar_lea.vmem [#allocation5], %s403
        %v405 = vld [vmem:[%s1] sm:$0xff]
        %v406 = vld [vmem:[%s366] sm:$0xff]
        %v407 = vld [vmem:[%s366 + $0x8] sm:$0xff]
        %v408 = vld [vmem:[%s366 + $0x10] sm:$0xff]
        %v409 = vld [vmem:[%s366 + $0x18] sm:$0xff]
        %v410 = vld [vmem:[%s366 + $0x20] sm:$0xff]
        %v411 = vld [vmem:[%s366 + $0x28] sm:$0xff]
        %v412 = vld [vmem:[%s366 + $0x30] sm:$0xff]
        %v413 = vld [vmem:[%s366 + $0x38] sm:$0xff]
        %v414 = vld [vmem:[%s366 + $0x40] sm:$0xff]
        %v415 = vld [vmem:[%s366 + $0x48] sm:$0xff]
        %v416 = vld [vmem:[%s366 + $0x50] sm:$0xff]
        %v417 = vld [vmem:[%s366 + $0x58] sm:$0xff]
        %v418 = vld [vmem:[%s2] sm:$0xff]
        %v419 = vld [vmem:[%s2 + $0x8] sm:$0xff]
        %v420 = vld [vmem:[%s366] sm:$0xff]
        %v421 = vld [vmem:[%s366 + $0x8] sm:$0xff]
        %v422 = vld [vmem:[%s366 + $0x10] sm:$0xff]
        %v423 = vld [vmem:[%s366 + $0x18] sm:$0xff]
        %v424 = vld [vmem:[%s366 + $0x20] sm:$0xff]
        %v425 = vld [vmem:[%s366 + $0x28] sm:$0xff]
        %v426 = vld [vmem:[%s366 + $0x30] sm:$0xff]
        %v427 = vld [vmem:[%s366 + $0x38] sm:$0xff]
        %v428 = vld [vmem:[%s366 + $0x40] sm:$0xff]
        %v429 = vld [vmem:[%s366 + $0x48] sm:$0xff]
        %v430 = vld [vmem:[%s366 + $0x50] sm:$0xff]
        %v431 = vld [vmem:[%s366 + $0x58] sm:$0xff]
        %v432 = vld [vmem:[%s366 + $0x60] sm:$0xff]
        %v433 = vld [vmem:[%s366 + $0x68] sm:$0xff]
        %v434 = vld [vmem:[%s366 + $0x70] sm:$0xff]
        %v435 = vld [vmem:[%s366 + $0x78] sm:$0xff]
        %v436 = vld [vmem:[%s366 + $0x80] sm:$0xff]
        %v437 = vld [vmem:[%s366 + $0x88] sm:$0xff]
        %v438 = vld [vmem:[%s366 + $0x90] sm:$0xff]
        %v439 = vld [vmem:[%s366 + $0x98] sm:$0xff]
        %v440 = vld [vmem:[%s366 + $0xa0] sm:$0xff]
        %v441 = vld [vmem:[%s366 + $0xa8] sm:$0xff]
        %v442 = vld [vmem:[%s366 + $0xb0] sm:$0xff]
        %v443 = vld [vmem:[%s366 + $0xb8] sm:$0xff]
        %v444 = vld [vmem:[%s366 + $0xc0] sm:$0xff]
        %v445 = vld [vmem:[%s366 + $0xc8] sm:$0xff]
        %v446 = vld [vmem:[%s366 + $0xd0] sm:$0xff]
        %v447 = vld [vmem:[%s366 + $0xd8] sm:$0xff]
        %v448 = vld [vmem:[%s366 + $0xe0] sm:$0xff]
        %v449 = vld [vmem:[%s366 + $0xe8] sm:$0xff]
        %v450 = vld [vmem:[%s366 + $0xf0] sm:$0xff]
        %v451 = vld [vmem:[%s366 + $0xf8] sm:$0xff]
        %v452 = vld [vmem:[%s366 + $0x100] sm:$0xff]
        %v453 = vld [vmem:[%s366 + $0x108] sm:$0xff]
        %v454 = vld [vmem:[%s366 + $0x110] sm:$0xff]
        %v455 = vld [vmem:[%s366 + $0x118] sm:$0xff]
        %v456 = vld [vmem:[%s366 + $0x120] sm:$0xff]
        %v457 = vld [vmem:[%s366 + $0x128] sm:$0xff]
        %v458 = vld [vmem:[%s366 + $0x130] sm:$0xff]
        %v459 = vld [vmem:[%s366 + $0x138] sm:$0xff]
        %v460 = vld [vmem:[%s366 + $0x140] sm:$0xff]
        %v461 = vld [vmem:[%s366 + $0x148] sm:$0xff]
        %v462 = vld [vmem:[%s366 + $0x150] sm:$0xff]
        %v463 = vld [vmem:[%s366 + $0x158] sm:$0xff]
        %v464 = vld [vmem:[%s366 + $0x160] sm:$0xff]
        %v465 = vld [vmem:[%s366 + $0x168] sm:$0xff]
        %v466 = vld [vmem:[%s366 + $0x170] sm:$0xff]
        %v467 = vld [vmem:[%s366 + $0x178] sm:$0xff]
        %v468 = vld [vmem:[%s366 + $0x180] sm:$0xff]
        %v469 = vld [vmem:[%s366 + $0x188] sm:$0xff]
        %v470 = vld [vmem:[%s366 + $0x190] sm:$0xff]
        %v471 = vld [vmem:[%s366 + $0x198] sm:$0xff]
        %v472 = vld [vmem:[%s366 + $0x1a0] sm:$0xff]
        %v473 = vld [vmem:[%s366 + $0x1a8] sm:$0xff]
        %v474 = vld [vmem:[%s366 + $0x1b0] sm:$0xff]
        %v475 = vld [vmem:[%s366 + $0x1b8] sm:$0xff]
        %v476 = vld [vmem:[%s366 + $0x1c0] sm:$0xff]
        %v477 = vld [vmem:[%s366 + $0x1c8] sm:$0xff]
        %v478 = vld [vmem:[%s366 + $0x1d0] sm:$0xff]
        %v479 = vld [vmem:[%s366 + $0x1d8] sm:$0xff]
        %v480 = vld [vmem:[%s366 + $0x1e0] sm:$0xff]
        %v481 = vld [vmem:[%s366 + $0x1e8] sm:$0xff]
        %v482 = vld [vmem:[%s366 + $0x1f0] sm:$0xff]
        %v483 = vld [vmem:[%s366 + $0x1f8] sm:$0xff]
        %v484 = vld [vmem:[%s3] sm:$0xff]
        %486 = vset.pattern.permute.xlu0 0
        %487 = vperm.xlu0 %486, %v484
        %v488 = vpop.permute.xlu0 %487
        %vm490 = vcmask 392192
        %v492 = vsel %vm490, %v405, 0
        %494 = vmatprep.subr.mxu0 %v407
        %495 = vmatpush1.msra.mxu0 %v406
        %496 = vmatprep.subr.mxu0 %v409
        %497 = vmatpush1.msra.mxu0 %v408
        %498 = vmatprep.subr.mxu0 %v411
        %499 = vmatpush1.msra.mxu0 %v410
        %500 = vmatprep.subr.mxu0 %v413
        %501 = vmatpush1.msra.mxu0 %v412
        %502 = vmatprep.subr.mxu0 %v415
        %503 = vmatpush1.msra.mxu0 %v414
        %504 = vmatprep.subr.mxu0 %v417
        %505 = vmatpush1.msra.mxu0 %v416
        %506 = vmatprep.subr.mxu0 0.0
        %507 = vmatpush1.msra.mxu0 0.0
        %508 = vmatprep.subr.mxu0 0.0
        %509 = vmatpush1.msra.mxu0 0.0
        %510 = vmatprep.subr.mxu0 0.0
        %511 = vmatpush1.msra.mxu0 0.0
        %512 = vmatprep.subr.mxu0 0.0
        %513 = vmatpush1.msra.mxu0 0.0
        %514 = vmatprep.subr.mxu0 0.0
        %515 = vmatpush1.msra.mxu0 0.0
        %516 = vmatprep.subr.mxu0 0.0
        %517 = vmatpush1.msra.mxu0 0.0
        %518 = vmatprep.subr.mxu0 0.0
        %519 = vmatpush1.msra.mxu0 0.0
        %520 = vmatprep.subr.mxu0 0.0
        %521 = vmatpush1.msra.mxu0 0.0
        %522 = vmatprep.subr.mxu0 0.0
        %523 = vmatpush1.msra.mxu0 0.0
        %524 = vmatprep.subr.mxu0 0.0
        %525 = vmatpush1.msra.mxu0 0.0
        %526 = vmatprep.subr.mxu0 0.0
        %527 = vmatpush1.msra.mxu0 0.0
        %528 = vmatprep.subr.mxu0 0.0
        %529 = vmatpush1.msra.mxu0 0.0
        %530 = vmatprep.subr.mxu0 0.0
        %531 = vmatpush1.msra.mxu0 0.0
        %532 = vmatprep.subr.mxu0 0.0
        %533 = vmatpush1.msra.mxu0 0.0
        %534 = vmatprep.subr.mxu0 0.0
        %535 = vmatpush1.msra.mxu0 0.0
        %536 = vmatprep.subr.mxu0 0.0
        %537 = vmatpush1.msra.mxu0 0.0
        %538 = vmatprep.subr.mxu0 0.0
        %539 = vmatpush1.msra.mxu0 0.0
        %540 = vmatprep.subr.mxu0 0.0
        %541 = vmatpush1.msra.mxu0 0.0
        %542 = vmatprep.subr.mxu0 0.0
        %543 = vmatpush1.msra.mxu0 0.0
        %544 = vmatprep.subr.mxu0 0.0
        %545 = vmatpush1.msra.mxu0 0.0
        %546 = vmatprep.subr.mxu0 0.0
        %547 = vmatpush1.msra.mxu0 0.0
        %548 = vmatprep.subr.mxu0 0.0
        %549 = vmatpush1.msra.mxu0 0.0
        %550 = vmatprep.subr.mxu0 0.0
        %551 = vmatpush1.msra.mxu0 0.0
        %552 = vmatprep.subr.mxu0 0.0
        %553 = vmatpush1.msra.mxu0 0.0
        %554 = vmatprep.subr.mxu0 0.0
        %555 = vmatpush1.msra.mxu0 0.0
        %556 = vmatprep.subr.mxu0 0.0
        %557 = vmatpush1.msra.mxu0 0.0
        %558 = vmatprep.mubr.f32.mxu0 0.0
        %559 = vmatmul.mubr.f32.gmra.mrb[0].mxu0 %v492
        %v560 = vpop.f32.mrb[0].mxu0
        %v561 = vadd.f32 %v488, %v560
        %v562 = vpop.f32.mrb[0].mxu0
        %v563 = vadd.f32 %v488, %v562
        %564 = vdwg.mxu0
        %v565 = vmax.f32 %v561, 0.0
        %v566 = vmax.f32 %v563, 0.0
        %v567 = vld [vmem:[%s4] sm:$0xff]
        %569 = vset.pattern.permute.xlu0 0
        %570 = vperm.xlu0 %569, %v567
        %v571 = vpop.permute.xlu0 %570
        %573 = vmatprep.subr.mxu0 %v421
        %574 = vmatpush1.msra.mxu0 %v420
        %575 = vmatprep.subr.mxu0 %v423
        %576 = vmatpush1.msra.mxu0 %v422
        %577 = vmatprep.subr.mxu0 %v425
        %578 = vmatpush1.msra.mxu0 %v424
        %579 = vmatprep.subr.mxu0 %v427
        %580 = vmatpush1.msra.mxu0 %v426
        %581 = vmatprep.subr.mxu0 %v429
        %582 = vmatpush1.msra.mxu0 %v428
        %583 = vmatprep.subr.mxu0 %v431
        %584 = vmatpush1.msra.mxu0 %v430
        %585 = vmatprep.subr.mxu0 %v433
        %586 = vmatpush1.msra.mxu0 %v432
        %587 = vmatprep.subr.mxu0 %v435
        %588 = vmatpush1.msra.mxu0 %v434
        %589 = vmatprep.subr.mxu0 %v437
        %590 = vmatpush1.msra.mxu0 %v436
        %591 = vmatprep.subr.mxu0 %v439
        %592 = vmatpush1.msra.mxu0 %v438
        %593 = vmatprep.subr.mxu0 %v441
        %594 = vmatpush1.msra.mxu0 %v440
        %595 = vmatprep.subr.mxu0 %v443
        %596 = vmatpush1.msra.mxu0 %v442
        %597 = vmatprep.subr.mxu0 %v445
        %598 = vmatpush1.msra.mxu0 %v444
        %599 = vmatprep.subr.mxu0 %v447
        %600 = vmatpush1.msra.mxu0 %v446
        %601 = vmatprep.subr.mxu0 %v449
        %602 = vmatpush1.msra.mxu0 %v448
        %603 = vmatprep.subr.mxu0 %v451
        %604 = vmatpush1.msra.mxu0 %v450
        %605 = vmatprep.subr.mxu0 %v453
        %606 = vmatpush1.msra.mxu0 %v452
        %607 = vmatprep.subr.mxu0 %v455
        %608 = vmatpush1.msra.mxu0 %v454
        %609 = vmatprep.subr.mxu0 %v457
        %610 = vmatpush1.msra.mxu0 %v456
        %611 = vmatprep.subr.mxu0 %v459
        %612 = vmatpush1.msra.mxu0 %v458
        %613 = vmatprep.subr.mxu0 %v461
        %614 = vmatpush1.msra.mxu0 %v460
        %615 = vmatprep.subr.mxu0 %v463
        %616 = vmatpush1.msra.mxu0 %v462
        %617 = vmatprep.subr.mxu0 %v465
        %618 = vmatpush1.msra.mxu0 %v464
        %619 = vmatprep.subr.mxu0 %v467
        %620 = vmatpush1.msra.mxu0 %v466
        %621 = vmatprep.subr.mxu0 %v469
        %622 = vmatpush1.msra.mxu0 %v468
        %623 = vmatprep.subr.mxu0 %v471
        %624 = vmatpush1.msra.mxu0 %v470
        %625 = vmatprep.subr.mxu0 %v473
        %626 = vmatpush1.msra.mxu0 %v472
        %627 = vmatprep.subr.mxu0 %v475
        %628 = vmatpush1.msra.mxu0 %v474
        %629 = vmatprep.subr.mxu0 %v477
        %630 = vmatpush1.msra.mxu0 %v476
        %631 = vmatprep.subr.mxu0 %v479
        %632 = vmatpush1.msra.mxu0 %v478
        %633 = vmatprep.subr.mxu0 %v481
        %634 = vmatpush1.msra.mxu0 %v480
        %635 = vmatprep.subr.mxu0 %v483
        %636 = vmatpush1.msra.mxu0 %v482
        %637 = vmatprep.mubr.f32.mxu0 %v419
        %638 = vmatmul.mubr.f32.gmra.mrb[0].mxu0 %v418
        %v639 = vpop.f32.mrb[0].mxu0
        %v640 = vadd.f32 %v571, %v639
        %v641 = vpop.f32.mrb[0].mxu0
        %v642 = vadd.f32 %v571, %v641
        %643 = vdwg.mxu0
        %v644 = vmax.f32 %v640, 0.0
        %v645 = vmax.f32 %v642, 0.0
        %v646 = vadd.f32 %v565, %v566
        %647 = vadd.xlane.f32.xlu0 %v646
        %v648 = vpop.xlane.xlu0 %647
        %v649 = vadd.f32 %v644, %v645
        %650 = vadd.xlane.f32.xlu0 %v649
        %v651 = vpop.xlane.xlu0 %650
        %v652 = vadd.f32 %v648, %v651
        %v653 = vmul.f32 %v652, 0.00390625
        %v654 = vld [vmem:[%s5] sm:$0xff]
        %v655 = vmul.f32 %v654, %v653
        %vm656 = vcmask 15360
        %v657 = vsel %vm656, %v655, 0.0
        %v658 = vrot.slane %v657, 4
        %v659 = vadd.f32 %v657, %v658
        %v660 = vrot.slane %v659, 2
        %v661 = vadd.f32 %v659, %v660
        %v662 = vrot.slane %v661, 1
        %v663 = vadd.f32 %v661, %v662
        %v664 = vld [vmem:[%s6] sm:$0x1]
        %v665 = vadd.f32 %v663, %v664
        %v666 = vmax.f32 %v665, 0.0
        %v667 = vld [vmem:[%s7] sm:$0xff]
        %v668 = vlaneseq
        %v669 = vshrl.u32 %v668, 7
        %v670 = vsub.s32 0, %v669
        %v671 = vrot.slane %v666, %v670
        %v672 = vmul.f32 %v667, %v671
        %v673 = vsel %vm656, %v672, 0.0
        %674 = vadd.xlane.f32.xlu0 %v673
        %v675 = vpop.xlane.xlu0 %674
        %v676 = vld [vmem:[%s9] sm:$0xff]
        %v677 = vadd.f32 %v675, %v676
        %v678 = vld [vmem:[%s8] sm:$0xff]
        %v679 = vmul.f32 %v678, %v671
        %v680 = vsel %vm656, %v679, 0.0
        %681 = vadd.xlane.f32.xlu0 %v680
        %v682 = vpop.xlane.xlu0 %681
        %v683 = vld [vmem:[%s10] sm:$0xff]
        %v684 = vadd.f32 %v682, %v683
        %v685 = vmax.f32 %v677, %v684
        %v686 = vsub.f32 %v677, %v685
        %v687 = vmul.f32 %v686, 1.442695
        %v688 = vpow.pop %v687
        %v689 = vsub.f32 %v684, %v685
        %v690 = vmul.f32 %v689, 1.442695
        %v691 = vpow.pop %v690
        %v692 = vadd.f32 %v688, %v691
        %v693 = vrcp.pop %v692
        %v694 = vmul.f32 %v688, %v693
        %696 = vset.pattern.permute.xlu0 0
        %697 = vperm.xlu0 %696, %v694
        %v698 = vpop.permute.xlu0 %697
        %v700 = vmul.f32 %v565, %v698
        %v701 = vmul.f32 %v566, %v698
        %v702 = vmul.f32 %v691, %v693
        %704 = vset.pattern.permute.xlu0 0
        %705 = vperm.xlu0 %704, %v702
        %v706 = vpop.permute.xlu0 %705
        %v708 = vmul.f32 %v644, %v706
        %v709 = vmul.f32 %v645, %v706
        %v710 = vadd.f32 %v700, %v708
        %v711 = vadd.f32 %v701, %v709
        %712 = vst [vmem:[%s404] sm:$0xff] %v710
        %713 = vst [vmem:[%s404 + $0x8] sm:$0xff] %v711
        %s714 = sand.u32 %s272, 1
        %s715 = scalar_lea.sflag [#allocation4], %s714
        %s716 = sand.u32 %s272, 1
        %s717 = smul.addr %s716, 16
        %s718 = scalar_lea.vmem [#allocation5], %s717
        // Predicated region
        $region69: #{tpu_custom_call.1} parent=63 // pred_check
          %p719 = pneg %p282
        $region70: #{tpu_custom_call.1} parent=63 // pred_check_branch
          %721 = sbr.rel (%p719) target = $region72
        $region71: #{tpu_custom_call.1} parent=63 // pred_region
          %s723 = ssub.s32 256, 256
          %724 = vsyncadd %s715, %s723
          %s725 = smul.addr %s28, 2
          %s726 = smul.addr %s725, 128
          %s727 = scalar_lea.hbm %s11, %s726
          %s729 = sshll.u32 %s718, 4
          %s730 = int_to_ptr.vmem [resolvable:$true] %s729
          %732 = dma.vmem_to_hbm [thread:$0]  %s730, 256, %s727, %s715
        $region72: #{tpu_custom_call.1} parent=63 // pred_fallthru
          _
      $region64: #{tpu_custom_call.1} parent=5 // pred_fallthru
        _
      %p733 = scmp.le.s32.totalorder 2, %s23
      // Predicated region
      $region73: #{tpu_custom_call.1} parent=5 // pred_check
        %p734 = pneg %p733
      $region74: #{tpu_custom_call.1} parent=5 // pred_check_branch
        %736 = sbr.rel (%p734) target = $region76
      $region75: #{tpu_custom_call.1} parent=5 // pred_region
        %s737 = ssub.s32 %s23, 2
        // Predicated region
        $region77: #{tpu_custom_call.1} parent=75 // pred_check
          %p738 = pneg %p288
        $region78: #{tpu_custom_call.1} parent=75 // pred_check_branch
          %740 = sbr.rel (%p738) target = $region80
        $region79: #{tpu_custom_call.1} parent=75 // pred_region
          %s741 = sand.u32 %s273, 1
          %s742 = scalar_lea.sflag [#allocation4], %s741
          %s743 = sand.u32 %s273, 1
          %s744 = smul.addr %s743, 16
          %s745 = scalar_lea.vmem [#allocation5], %s744
          %746 = dma.done %s742, 256
        $region80: #{tpu_custom_call.1} parent=75 // pred_fallthru
          _
      $region76: #{tpu_custom_call.1} parent=5 // pred_fallthru
        _
    $region6: #{tpu_custom_call.1} parent=1 // loop_footer
      %s27 = sadd.s32 1, %s23
    $region7: #{tpu_custom_call.1} parent=1 // loop_footer_branch
      %22 = sbr.rel target = $region3
    $region8: #{tpu_custom_call.1} parent=1 // loop_exit
      _
    %747 = vsyncpa [#allocation3], 1
    %s748 = scalar_lea.sflag [#allocation3], 1
    %749 = vsyncpa %s748, 1
    %750 = vsyncpa [#allocation4], 1
    %s751 = scalar_lea.sflag [#allocation4], 1
    %752 = vsyncpa %s751, 1

</llo_original>
